<compile_context>
chip_gen: v7x
topology: tpu7x:2x2x1
jax: 0.10.0
libtpu: 0.0.40
codegen_flags: <defaults>
</compile_context>

<pallas_src>
import functools

import numpy as np
import jax
import jax.numpy as jnp
from jax.experimental import pallas as pl
from jax.experimental.pallas import tpu as pltpu


# ---------------------------------------------------------------------------
# Positional-encoding table (identical math to the PyTorch __init__ buffer).
# ---------------------------------------------------------------------------
def _build_pe_table(d_model: int, max_len: int = 5000) -> jnp.ndarray:
    """Returns (max_len, d_model) float32 with pe[:, 0::2]=sin, pe[:, 1::2]=cos."""
    assert d_model % 2 == 0, "PositionalEncoding assumes an even d_model"
    position = jnp.arange(max_len, dtype=jnp.float32)[:, None]                 # (L, 1)
    div_term = jnp.exp(jnp.arange(0, d_model, 2, dtype=jnp.float32)
                       * (-np.log(10000.0) / d_model))                         # (D/2,)
    angles = position * div_term[None, :]                                      # (L, D/2)
    pe = jnp.stack([jnp.sin(angles), jnp.cos(angles)], axis=-1)                # (L, D/2, 2)
    return pe.reshape(max_len, d_model)                                        # (L, D)


# ---------------------------------------------------------------------------
# Kernel: pure HBM-bandwidth-bound broadcast add; f32 accumulate, store in
# the output dtype. Handles both the (ts, B, D)+(ts, 1, D) broadcast path and
# the flattened (ts, L)+(ts, L) path.
# ---------------------------------------------------------------------------
def _pe_add_kernel(x_ref, pe_ref, o_ref):
    o_ref[...] = (x_ref[...].astype(jnp.float32)
                  + pe_ref[...].astype(jnp.float32)).astype(o_ref.dtype)


# ---------------------------------------------------------------------------
# Tiling helpers.
# ---------------------------------------------------------------------------
def _round_up(v: int, m: int) -> int:
    return ((v + m - 1) // m) * m


def _sublane_multiple(dtype) -> int:
    # rows packed per 32-bit sublane: f32 -> 8, bf16/f16 -> 16, int8/fp8 -> 32
    return max(8, 32 // jnp.dtype(dtype).itemsize)


def _choose_row_tile(n_rows: int, row_bytes: int, align: int,
                     target_bytes: int) -> int:
    """Rows per block: ~target_bytes of x per block, aligned to `align` rows."""
    ts = max(align, (target_bytes // max(row_bytes, 1)) // align * align)
    # v7x has 2 TensorCores and dimension_semantics=("parallel",) shards grid
    # steps across them: never collapse to a single step when the row axis is
    # long enough to split on an aligned boundary.
    if n_rows >= 2 * align:
        ts = min(ts, _round_up(pl.cdiv(n_rows, 2), align))
    else:
        ts = min(ts, n_rows)          # single full block (equals the full dim)
    return ts


def _pick_lane_width(total_elems: int):
    """Largest lane width (multiple of 128) dividing the flattened size."""
    candidates = [L for L in (1024, 512, 256, 128) if total_elems % L == 0]
    if not candidates:
        return None
    for L in candidates:              # prefer keeping >= 8 rows (full sublanes)
        if total_elems // L >= 8:
            return L
    return candidates[-1]


def _vmem_limit_bytes(per_step_block_bytes: int) -> int:
    # Pallas double-buffers each pipelined operand => footprint = 2x the sum of
    # one block of each. Give ~2x headroom on top for compiler scratch, and
    # clamp: >=32 MiB lifts v5e's 16 MiB scoped default, <=56 MiB stays under
    # v7x's 64 MiB physical VMEM (v5e/v6e have 128 MiB physical).
    return int(min(56 << 20, max(32 << 20, 4 * per_step_block_bytes)))


# ---------------------------------------------------------------------------
# Forward implementations (jitted per shape by the module wrapper).
# ---------------------------------------------------------------------------
def _forward_3d(x, pe3d, *, donate: bool):
    # Path A: d_model % 128 == 0 -> natural (ts, B, D) block is lane-dense and
    # pe HBM traffic stays 1/batch of x's. pe3d is the full cached
    # (max_len, 1, D) f32 buffer; the BlockSpec windows the rows it needs.
    S, B, D = x.shape
    itemsize = jnp.dtype(x.dtype).itemsize
    ts = _choose_row_tile(S, B * D * itemsize, align=8, target_bytes=8 << 20)
    block_bytes = 2 * ts * B * D * itemsize + ts * D * 4      # x + out + pe(f32)
    return pl.pallas_call(
        _pe_add_kernel,
        out_shape=jax.ShapeDtypeStruct((S, B, D), x.dtype),
        grid=(pl.cdiv(S, ts),),
        in_specs=[
            pl.BlockSpec((ts, B, D), lambda i: (i, 0, 0)),
            pl.BlockSpec((ts, 1, D), lambda i: (i, 0, 0)),
        ],
        out_specs=pl.BlockSpec((ts, B, D), lambda i: (i, 0, 0)),
        input_output_aliases=({0: 0} if donate else {}),
        compiler_params=pltpu.CompilerParams(
            dimension_semantics=("parallel",),
            vmem_limit_bytes=_vmem_limit_bytes(block_bytes),
        ),
    )(x, pe3d)


def _forward_flat(x, pe_flat, *, donate: bool):
    # Path B: small / unaligned d_model -> lane-dense flattened layout.
    # pe_flat is the cached batch-broadcast table in x.dtype, already laid out
    # in the same flattened (R, L) order as x.reshape(R, L).
    S, B, D = x.shape
    R, L = pe_flat.shape
    x_flat = x.reshape(R, L)
    itemsize = jnp.dtype(x.dtype).itemsize
    align = _sublane_multiple(x.dtype)        # ts is the sublane dim here
    ts = _choose_row_tile(R, L * itemsize, align=align, target_bytes=4 << 20)
    block_bytes = 3 * ts * L * itemsize       # x + pe + out, all in x.dtype
    out = pl.pallas_call(
        _pe_add_kernel,
        out_shape=jax.ShapeDtypeStruct((R, L), x.dtype),
        grid=(pl.cdiv(R, ts),),
        in_specs=[
            pl.BlockSpec((ts, L), lambda i: (i, 0)),
            pl.BlockSpec((ts, L), lambda i: (i, 0)),
        ],
        out_specs=pl.BlockSpec((ts, L), lambda i: (i, 0)),
        input_output_aliases=({0: 0} if donate else {}),
        compiler_params=pltpu.CompilerParams(
            dimension_semantics=("parallel",),
            vmem_limit_bytes=_vmem_limit_bytes(block_bytes),
        ),
    )(x_flat, pe_flat)
    return out.reshape(S, B, D)


# ---------------------------------------------------------------------------
# Module wrapper (mirrors the PyTorch nn.Module interface).
# ---------------------------------------------------------------------------
class PositionalEncoding:
    def __init__(self, d_model: int, max_len: int = 5000,
                 donate_input: bool = False):
        self.d_model = d_model
        self.max_len = max_len
        self.donate_input = donate_input
        self.pe_table = _build_pe_table(d_model, max_len)      # (max_len, D) f32
        self.pe3d = self.pe_table[:, None, :]                  # (max_len, 1, D), cached once
        self._flat_pe_cache = {}                               # (S,B,D,dtype) -> (R,L) table

        donate_argnums = (0,) if donate_input else ()
        self._fwd3d = jax.jit(
            functools.partial(_forward_3d, donate=donate_input),
            donate_argnums=donate_argnums)
        self._fwd_flat = jax.jit(
            functools.partial(_forward_flat, donate=donate_input),
            donate_argnums=donate_argnums)

    @property
    def pe(self) -> jnp.ndarray:
        # (max_len, 1, d_model): same layout as the PyTorch registered buffer.
        return self.pe3d

    def _get_flat_pe(self, S: int, B: int, D: int, dtype) -> jnp.ndarray:
        key = (S, B, D, jnp.dtype(dtype).str)
        pe = self._flat_pe_cache.get(key)
        if pe is None:
            total = S * B * D
            L = _pick_lane_width(total)
            # Batch-broadcast pe in x.dtype, flattened in x's memory order.
            # (bf16 cache: ~1e-3 rel error on the encoding, fine for bf16 x.)
            full = jnp.broadcast_to(self.pe_table[:S, None, :], (S, B, D)).astype(dtype)
            if L is not None:
                pe = full.reshape(total // L, L)      # lane-dense (multiple of 128)
            else:
                pe = full.reshape(S, B * D)           # fallback: full-width blocks
            pe = jax.block_until_ready(pe)            # materialize cache off the hot path
            self._flat_pe_cache[key] = pe
        return pe

    def __call__(self, x: jnp.ndarray) -> jnp.ndarray:
        seq_len, batch, d_model = x.shape
        assert d_model == self.d_model, "d_model mismatch with the pe buffer"
        assert seq_len <= self.max_len, "sequence longer than max_len"
        if d_model % 128 == 0:
            return self._fwd3d(x, self.pe3d)
        return self._fwd_flat(x, self._get_flat_pe(seq_len, batch, d_model, x.dtype))


if __name__ == "__main__":
    # --- demo config matching the module's forward: (seq=8, batch=2, d_model=32) ---
    seq_len, batch, d_model = 8, 2, 32
    module = PositionalEncoding(d_model, max_len=64)           # no donation (default)

    key = jax.random.PRNGKey(0)
    x = jax.random.normal(key, (seq_len, batch, d_model), dtype=jnp.float32)

    ref = x + module.pe[:seq_len]
    out = jax.block_until_ready(module(x))
    assert out.shape == (seq_len, batch, d_model) and out.dtype == x.dtype
    np.testing.assert_allclose(np.asarray(out), np.asarray(ref), rtol=1e-6, atol=1e-6)

    # --- second config (128-aligned d_model, bf16) exercises the 3-D broadcast
    #     path with explicit input donation (reference computed BEFORE the call) ---
    s2, b2, d2 = 16, 8, 128
    module2 = PositionalEncoding(d2, max_len=64, donate_input=True)
    x2 = jax.random.normal(jax.random.PRNGKey(1), (s2, b2, d2), dtype=jnp.bfloat16)
    ref2 = (x2.astype(jnp.float32) + module2.pe[:s2]).astype(jnp.bfloat16)
    out2 = jax.block_until_ready(module2(x2))                  # x2 is donated here
    np.testing.assert_allclose(np.asarray(out2).astype(np.float32),
                               np.asarray(ref2).astype(np.float32),
                               rtol=1e-2, atol=1e-2)

    print("KERNEL_OK")
</pallas_src>

<mosaic_0001>
module attributes {stable_mosaic.version = 11 : i64} {
  func.func @_pe_add_kernel(%arg0: i32, %arg1: memref<4x128xf32, #tpu.memory_space<vmem>>, %arg2: memref<4x128xf32, #tpu.memory_space<vmem>>, %arg3: memref<4x128xf32, #tpu.memory_space<vmem>>) attributes {dimension_semantics = [#tpu.dimension_semantics<parallel>], iteration_bounds = array<i64: 1>, scalar_prefetch = 0 : i64, scratch_operands = 0 : i64, tpu.core_type = #tpu.core_type<tc>, window_params = [{transform_indices = @transform_0, window_bounds = array<i64: 4, 128>}, {transform_indices = @transform_1, window_bounds = array<i64: 4, 128>}, {transform_indices = @transform_2, window_bounds = array<i64: 4, 128>}]} {
    %c0 = arith.constant 0 : index
    %c0_0 = arith.constant 0 : index
    %0 = vector.load %arg1[%c0, %c0_0] : memref<4x128xf32, #tpu.memory_space<vmem>>, vector<4x128xf32>
    %c0_1 = arith.constant 0 : index
    %c0_2 = arith.constant 0 : index
    %1 = vector.load %arg2[%c0_1, %c0_2] : memref<4x128xf32, #tpu.memory_space<vmem>>, vector<4x128xf32>
    %2 = arith.addf %0, %1 : vector<4x128xf32>
    %c0_3 = arith.constant 0 : index
    %c0_4 = arith.constant 0 : index
    %3 = vector.load %arg3[%c0_3, %c0_4] : memref<4x128xf32, #tpu.memory_space<vmem>>, vector<4x128xf32>
    tpu.vector_store %arg3[%c0_3, %c0_4], %2 {strides = array<i32>} : memref<4x128xf32, #tpu.memory_space<vmem>>, vector<4x128xf32>,
    return
  }
  func.func @transform_0(%arg0: i32) -> (i32, i32) {
    %c0_i32 = arith.constant 0 : i32
    %c0_i32_0 = arith.constant 0 : i32
    return %arg0, %c0_i32 : i32, i32
  }
  func.func @transform_1(%arg0: i32) -> (i32, i32) {
    %c0_i32 = arith.constant 0 : i32
    %c0_i32_0 = arith.constant 0 : i32
    return %arg0, %c0_i32 : i32, i32
  }
  func.func @transform_2(%arg0: i32) -> (i32, i32) {
    %c0_i32 = arith.constant 0 : i32
    %c0_i32_0 = arith.constant 0 : i32
    return %arg0, %c0_i32 : i32, i32
  }
}

</mosaic_0001>

<llo_original>
// kernel: _forward_flat.1
$region0: #{_forward_flat.1}
  #allocation0 [shape = 'u32[]', space=smem, size = 0x4, offset = 0x4, fixed_abs, tag = 'smem constant byte address 0x4 - core index']
  #allocation1 [shape = 'u32[144,128]{1,0:T(1,128)}', space=vmem, size = 0x12000, scoped, tag = 'internal scratch']
  %s0 = inlined_call_operand.vmem [shape: f32[4,128], index: 0, kind: input, shape index: {}]
  %s1 = inlined_call_operand.vmem [shape: f32[4,128], index: 1, kind: input, shape index: {}]
  %s2 = inlined_call_operand.vmem [shape: f32[4,128], index: 2, kind: output, shape index: {}]
  %s3 = sld [smem:[#allocation0]]
  $region18: #{_forward_flat.1} parent=0
    _
  %s5 = ssub.s32 1, %s3
  %s6 = scalar_select 0, %s5, %s3
  // Predicated region
  $region2: #{_forward_flat.1} parent=0 // pred_check
    _
  $region3: #{_forward_flat.1} parent=0 // pred_check_branch
    %8 = sbr.rel (0) target = $region5
  $region4: #{_forward_flat.1} parent=0 // pred_region
    _
  $region5: #{_forward_flat.1} parent=0 // pred_fallthru
    _
  // Predicated region
  $region6: #{_forward_flat.1} parent=0 // pred_check
    _
  $region7: #{_forward_flat.1} parent=0 // pred_check_branch
    %10 = sbr.rel (0) target = $region9
  $region8: #{_forward_flat.1} parent=0 // pred_region
    _
  $region9: #{_forward_flat.1} parent=0 // pred_fallthru
    _
  %v11 = vld [vmem:[%s0] sm:$0xf]
  %v12 = vld [vmem:[%s1] sm:$0xf]
  %v13 = vadd.f32 %v11, %v12
  %14 = vst [vmem:[%s2] sm:$0xf] %v13
  // Predicated region
  $region10: #{_forward_flat.1} parent=0 // pred_check
    _
  $region11: #{_forward_flat.1} parent=0 // pred_check_branch
    %16 = sbr.rel (0) target = $region13
  $region12: #{_forward_flat.1} parent=0 // pred_region
    _
  $region13: #{_forward_flat.1} parent=0 // pred_fallthru
    _
  // Predicated region
  $region14: #{_forward_flat.1} parent=0 // pred_check
    _
  $region15: #{_forward_flat.1} parent=0 // pred_check_branch
    %18 = sbr.rel (0) target = $region17
  $region16: #{_forward_flat.1} parent=0 // pred_region
    _
  $region17: #{_forward_flat.1} parent=0 // pred_fallthru
    _

</llo_original>
